<compile_context>
chip_gen: v5e
topology: v5e:2x2
jax: 0.10.0
libtpu: 0.0.40
codegen_flags: <defaults>
</compile_context>

<pallas_src>
import jax
import jax.numpy as jnp
from jax.experimental import pallas as pl
from jax.experimental.pallas import tpu as pltpu


def _round_up(n: int, m: int) -> int:
    return (n + m - 1) // m * m


# --------------------------- parameter packing --------------------------------
def pack_params(p, Da, Dt, Dv, *, L=128, dtype=jnp.bfloat16):
    """Pack all parameters into one [R, L] buffer (L = 128-lane padded width).

    Row bands start at multiples of 16 sublanes (bf16 packing granularity), so
    the static row slices inside the kernel never cross (16,128) tile bounds.
    """
    H = p["wa"].shape[1]
    H3 = 3 * H
    out1 = p["w1"].shape[1]
    out2 = p["w2"].shape[1]
    assert H + H3 <= L, "fused [feat | heads] slab must fit in L lanes"
    assert out1 + out2 <= H3, "fused head must fit into 3H lanes"

    def zpad(a, rows, cols=L):
        z = jnp.zeros((rows, cols), jnp.float32)
        return z.at[: a.shape[0], : a.shape[1]].set(a.astype(jnp.float32))

    # Per-modality projections, each spanning the full L lanes with its own
    # column band (block-diagonal projection realised as 3 accumulating matmuls).
    Wa = jnp.zeros((Da, L), jnp.float32).at[:, 0:H].set(p["wa"])
    Wt = jnp.zeros((Dt, L), jnp.float32).at[:, H:2 * H].set(p["wt"])
    Wv = jnp.zeros((Dv, L), jnp.float32).at[:, 2 * H:3 * H].set(p["wv"])
    b_in = zpad(jnp.concatenate([p["ba"], p["bt"], p["bv"]], axis=1), 1)

    # attention_mlp: real weight in rows 0:3H / cols 0:H, rest zero.
    W_att = zpad(p["watt"], L)                                      # [L, L]
    b_att = zpad(p["batt"], 1)

    # fc_att with each modality column repeated H times along lanes so the
    # fusion is a plain elementwise multiply against hid3.
    W_fa = zpad(jnp.repeat(p["wfa"], H, axis=1), L)                 # [L, L]
    b_fa = zpad(jnp.repeat(p["bfa"], H, axis=1), 1)

    # Fused "sum-the-3-bands + both output heads" matmul:
    #   W_out = [ S | vstack([W_hd]*3) ]  with S = 3 stacked HxH identities,
    # so  w @ W_out = [ fused | fused @ W_hd ]  in one lane-dense slab.
    eye = jnp.eye(H, dtype=jnp.float32)
    S = jnp.concatenate([eye, eye, eye], axis=0)                    # [3H, H]
    pad_c = H3 - out1 - out2
    W_hd = jnp.concatenate(
        [p["w1"], p["w2"], jnp.zeros((H, pad_c), jnp.float32)], axis=1)   # [H, 3H]
    W_out = jnp.concatenate([S, jnp.concatenate([W_hd] * 3, axis=0)], axis=1)
    W_out = zpad(W_out, L)                                          # [L, L]
    b_hd = jnp.concatenate(
        [p["b1"], p["b2"], jnp.zeros((1, pad_c), jnp.float32)], axis=1)   # [1, 3H]
    b_out = zpad(
        jnp.concatenate([jnp.zeros((1, H), jnp.float32), b_hd], axis=1), 1)

    mats = [("Wa", Wa), ("Wt", Wt), ("Wv", Wv), ("b_in", b_in),
            ("W_att", W_att), ("b_att", b_att),
            ("W_fa", W_fa), ("b_fa", b_fa),
            ("W_out", W_out), ("b_out", b_out)]

    row_align = 16 if dtype == jnp.bfloat16 else 8
    layout = {}
    bands = []
    row = 0
    for name, m in mats:
        r = m.shape[0]
        rb = _round_up(r, row_align)
        bands.append(zpad(m, rb))
        layout[name] = (row, r)          # (band start, live rows) -- python ints
        row += rb
    P = jnp.concatenate(bands, axis=0).astype(dtype)   # [R, L]
    return P, layout


# ----------------------------- Pallas kernel ----------------------------------
def make_fused_kernel(layout):
    """Kernel closure over the static packing layout."""

    def kernel(a_ref, t_ref, v_ref, p_ref, o_ref):
        f32 = jnp.float32
        wdt = p_ref.dtype   # bf16 matmul operands; accumulation stays f32

        def band(name):
            r0, nr = layout[name]
            return p_ref[r0:r0 + nr, :]

        def bias(name):
            r0, _ = layout[name]
            # [1, L] row; broadcast add against the f32 accumulator is hoisted
            # once per tile (stride-0 sublane-broadcast load skipped: bf16
            # sublane-packed strided loads are a lowering risk for zero gain).
            return p_ref[r0:r0 + 1, :].astype(f32)

        # (1) per-modality Linear + ReLU -> one 128-lane hidden [bt, L]
        #     (block-diagonal projection = 3 accumulating matmuls, no concat)
        hid3 = (jnp.dot(a_ref[...], band("Wa"), preferred_element_type=f32)
                + jnp.dot(t_ref[...], band("Wt"), preferred_element_type=f32)
                + jnp.dot(v_ref[...], band("Wv"), preferred_element_type=f32)
                + bias("b_in"))
        hid3 = jnp.maximum(hid3, 0.0)                       # f32, lanes 3H:L stay 0

        # (2) attention MLP (Linear + ReLU); padded lanes stay exactly 0.
        att_h = jnp.maximum(
            jnp.dot(hid3.astype(wdt), band("W_att"), preferred_element_type=f32)
            + bias("b_att"), 0.0)

        # (3) fc_att with modality weights repeated along lanes -> [bt, L]
        att_rep = (jnp.dot(att_h.astype(wdt), band("W_fa"),
                           preferred_element_type=f32) + bias("b_fa"))

        # (4)+(5) attention-weighted fusion + both output heads + store, fused
        # into ONE matmul producing a lane-dense 128-wide slab [fused | heads].
        w = hid3 * att_rep                                  # f32 elementwise (VPU)
        out = (jnp.dot(w.astype(wdt), band("W_out"), preferred_element_type=f32)
               + bias("b_out"))
        o_ref[...] = out.astype(o_ref.dtype)                # single unmasked vst

    return kernel


# -------------------------------- wrapper --------------------------------------
def attention_forward(batch, params, packed=None, *, batch_tile=None):
    audio, text, video = batch["audios"], batch["texts"], batch["videos"]
    B = audio.shape[0]
    Da, Dt, Dv = audio.shape[1], text.shape[1], video.shape[1]
    H = params["wa"].shape[1]
    H3 = 3 * H
    out1 = params["w1"].shape[1]
    out2 = params["w2"].shape[1]
    L = max(128, _round_up(H + H3, 128))                    # 128 for H=32

    # Pack parameters once (callers should cache `packed` across steps).
    if packed is None:
        packed = pack_params(params, Da, Dt, Dv, L=L)
    P, layout = packed
    wdt = P.dtype

    # Three separate activation streams (no wrapper-side concat); bf16 operands.
    a = audio.astype(wdt)
    t = text.astype(wdt)
    v = video.astype(wdt)

    # Batch tiling: big lane-dense tiles (cap 512 ~ HBM-roofline sweet spot);
    # keep >=2 grid steps when the batch is large so both v7x TCs get work.
    cap = 512
    bt = batch_tile
    if bt is None:
        bt = min(max(_round_up(B, 8), 8), cap)
        if B >= 64 and pl.cdiv(B, bt) < 2:
            bt = max(8, _round_up(pl.cdiv(B, 2), 8))
    bt = _round_up(bt, 8)
    if bt >= 16:
        bt = _round_up(bt, 16)                              # bf16 sublane packing
    Bp = pl.cdiv(B, bt) * bt
    if Bp > B:
        pad = ((0, Bp - B), (0, 0))
        a, t, v = jnp.pad(a, pad), jnp.pad(t, pad), jnp.pad(v, pad)

    kernel = make_fused_kernel(layout)
    grid = (Bp // bt,)
    act_specs = [
        pl.BlockSpec((bt, Da), lambda i: (i, 0)),
        pl.BlockSpec((bt, Dt), lambda i: (i, 0)),
        pl.BlockSpec((bt, Dv), lambda i: (i, 0)),
    ]
    out_spec = pl.BlockSpec((bt, L), lambda i: (i, 0))
    out_shape = jax.ShapeDtypeStruct((Bp, L), jnp.float32)
    cparams = pltpu.CompilerParams(dimension_semantics=("parallel",))

    def run(param_spec):
        return pl.pallas_call(
            kernel,
            out_shape=out_shape,
            grid=grid,
            in_specs=act_specs + [param_spec],
            out_specs=out_spec,
            compiler_params=cparams,
        )(a, t, v, P)

    try:
        # Params never change across grid steps (constant index_map) -> ask for
        # single buffering; fall back silently if this Pallas build rejects it.
        out = run(pl.BlockSpec(P.shape, lambda i: (0, 0),
                               pipeline_mode=pl.Buffered(1)))
    except Exception:
        out = run(pl.BlockSpec(P.shape, lambda i: (0, 0)))

    out = out[:B]
    feat = out[:, 0:H]
    emos = out[:, H:H + out1]
    vals = out[:, H + out1:H + out1 + out2]
    interloss = jnp.zeros((), jnp.float32)                  # torch.tensor(0) in reference
    return feat, emos, vals, interloss


# --------------------------- pure-JAX reference ---------------------------------
def attention_forward_ref(batch, p):
    relu = lambda x: jnp.maximum(x, 0.0)
    a_h = relu(batch["audios"] @ p["wa"] + p["ba"])
    t_h = relu(batch["texts"] @ p["wt"] + p["bt"])
    v_h = relu(batch["videos"] @ p["wv"] + p["bv"])
    cat = jnp.concatenate([a_h, t_h, v_h], axis=1)
    att_h = relu(cat @ p["watt"] + p["batt"])
    att = att_h @ p["wfa"] + p["bfa"]                       # [B, 3]
    stacked = jnp.stack([a_h, t_h, v_h], axis=2)            # [B, H, 3]
    fused = jnp.einsum("bhm,bm->bh", stacked, att)
    emos = fused @ p["w1"] + p["b1"]
    vals = fused @ p["w2"] + p["b2"]
    return fused, emos, vals, jnp.zeros((), jnp.float32)


# -------------------------------- param init ------------------------------------
def init_params(key, audio_dim, text_dim, video_dim, hidden, out1, out2):
    keys = jax.random.split(key, 14)

    def lin(kw, kb, din, dout, scale=0.05):
        w = scale * jax.random.normal(kw, (din, dout), jnp.float32)
        b = scale * jax.random.normal(kb, (1, dout), jnp.float32)
        return w, b

    wa, ba = lin(keys[0], keys[1], audio_dim, hidden)
    wt, bt = lin(keys[2], keys[3], text_dim, hidden)
    wv, bv = lin(keys[4], keys[5], video_dim, hidden)
    watt, batt = lin(keys[6], keys[7], 3 * hidden, hidden)
    wfa, bfa = lin(keys[8], keys[9], hidden, 3)
    w1, b1 = lin(keys[10], keys[11], hidden, out1)
    w2, b2 = lin(keys[12], keys[13], hidden, out2)
    return dict(wa=wa, ba=ba, wt=wt, bt=bt, wv=wv, bv=bv,
                watt=watt, batt=batt, wfa=wfa, bfa=bfa,
                w1=w1, b1=b1, w2=w2, b2=b2)


if __name__ == "__main__":
    # Small shapes consistent with the MER 'attention' model config.
    B, AUDIO_DIM, TEXT_DIM, VIDEO_DIM = 8, 32, 48, 64
    HIDDEN, OUT1, OUT2 = 32, 6, 1

    key = jax.random.PRNGKey(0)
    k_a, k_t, k_v, k_p = jax.random.split(key, 4)
    batch = {
        "audios": jax.random.normal(k_a, (B, AUDIO_DIM), jnp.float32),
        "texts": jax.random.normal(k_t, (B, TEXT_DIM), jnp.float32),
        "videos": jax.random.normal(k_v, (B, VIDEO_DIM), jnp.float32),
    }
    params = init_params(k_p, AUDIO_DIM, TEXT_DIM, VIDEO_DIM, HIDDEN, OUT1, OUT2)

    feat, emos, vals, interloss = jax.block_until_ready(
        attention_forward(batch, params))

    # correctness check vs pure-f32 pure-JAX reference (bf16 operands -> relaxed tol)
    feat_r, emos_r, vals_r, _ = attention_forward_ref(batch, params)
    assert jnp.allclose(feat, feat_r, atol=2e-2, rtol=2e-2), "features mismatch"
    assert jnp.allclose(emos, emos_r, atol=2e-2, rtol=2e-2), "emos_out mismatch"
    assert jnp.allclose(vals, vals_r, atol=2e-2, rtol=2e-2), "vals_out mismatch"

    print("KERNEL_OK")
</pallas_src>

<mosaic_0001>
module attributes {stable_mosaic.version = 11 : i64} {
  func.func @kernel(%arg0: i32, %arg1: memref<8x32xbf16, #tpu.memory_space<vmem>>, %arg2: memref<8x48xbf16, #tpu.memory_space<vmem>>, %arg3: memref<8x64xbf16, #tpu.memory_space<vmem>>, %arg4: memref<592x128xbf16, #tpu.memory_space<vmem>>, %arg5: memref<8x128xf32, #tpu.memory_space<vmem>>) attributes {dimension_semantics = [#tpu.dimension_semantics<parallel>], iteration_bounds = array<i64: 1>, scalar_prefetch = 0 : i64, scratch_operands = 0 : i64, tpu.core_type = #tpu.core_type<tc>, window_params = [{transform_indices = @transform_0, window_bounds = array<i64: 8, 32>}, {transform_indices = @transform_1, window_bounds = array<i64: 8, 48>}, {transform_indices = @transform_2, window_bounds = array<i64: 8, 64>}, {pipeline_mode = #tpu.pipeline_mode<synchronous>, transform_indices = @transform_3, window_bounds = array<i64: 592, 128>}, {transform_indices = @transform_4, window_bounds = array<i64: 8, 128>}]} {
    %c0 = arith.constant 0 : index
    %c0_0 = arith.constant 0 : index
    %0 = vector.load %arg1[%c0, %c0_0] : memref<8x32xbf16, #tpu.memory_space<vmem>>, vector<8x32xbf16>
    %c0_1 = arith.constant 0 : index
    %c0_2 = arith.constant 0 : index
    %1 = vector.load %arg4[%c0_1, %c0_2] : memref<592x128xbf16, #tpu.memory_space<vmem>>, vector<32x128xbf16>
    %cst = arith.constant dense<0.000000e+00> : vector<8x128xf32>
    %2 = tpu.matmul %0, %1, %cst {dimension_numbers = #tpu.dot_dimension_numbers<[1], [0], [0], [1], [0, 0, 1, 1], [], []>} : vector<8x32xbf16>, vector<32x128xbf16>, vector<8x128xf32> -> vector<8x128xf32>
    %c0_3 = arith.constant 0 : index
    %c0_4 = arith.constant 0 : index
    %3 = vector.load %arg2[%c0_3, %c0_4] : memref<8x48xbf16, #tpu.memory_space<vmem>>, vector<8x48xbf16>
    %c32 = arith.constant 32 : index
    %c0_5 = arith.constant 0 : index
    %4 = vector.load %arg4[%c32, %c0_5] : memref<592x128xbf16, #tpu.memory_space<vmem>>, vector<48x128xbf16>
    %cst_6 = arith.constant dense<0.000000e+00> : vector<8x128xf32>
    %5 = tpu.matmul %3, %4, %cst_6 {dimension_numbers = #tpu.dot_dimension_numbers<[1], [0], [0], [1], [0, 0, 1, 1], [], []>} : vector<8x48xbf16>, vector<48x128xbf16>, vector<8x128xf32> -> vector<8x128xf32>
    %6 = arith.addf %2, %5 : vector<8x128xf32>
    %c0_7 = arith.constant 0 : index
    %c0_8 = arith.constant 0 : index
    %7 = vector.load %arg3[%c0_7, %c0_8] : memref<8x64xbf16, #tpu.memory_space<vmem>>, vector<8x64xbf16>
    %c80 = arith.constant 80 : index
    %c0_9 = arith.constant 0 : index
    %8 = vector.load %arg4[%c80, %c0_9] : memref<592x128xbf16, #tpu.memory_space<vmem>>, vector<64x128xbf16>
    %cst_10 = arith.constant dense<0.000000e+00> : vector<8x128xf32>
    %9 = tpu.matmul %7, %8, %cst_10 {dimension_numbers = #tpu.dot_dimension_numbers<[1], [0], [0], [1], [0, 0, 1, 1], [], []>} : vector<8x64xbf16>, vector<64x128xbf16>, vector<8x128xf32> -> vector<8x128xf32>
    %10 = arith.addf %6, %9 : vector<8x128xf32>
    %c144 = arith.constant 144 : index
    %c0_11 = arith.constant 0 : index
    %11 = vector.load %arg4[%c144, %c0_11] : memref<592x128xbf16, #tpu.memory_space<vmem>>, vector<1x128xbf16>
    %12 = arith.extf %11 : vector<1x128xbf16> to vector<1x128xf32>
    %13 = vector.broadcast %12 : vector<1x128xf32> to vector<8x128xf32>
    %14 = arith.addf %10, %13 : vector<8x128xf32>
    %cst_12 = arith.constant 0.000000e+00 : f32
    %15 = vector.broadcast %cst_12 : f32 to vector<8x128xf32>
    %16 = arith.maximumf %14, %15 : vector<8x128xf32>
    %17 = arith.truncf %16 : vector<8x128xf32> to vector<8x128xbf16>
    %c160 = arith.constant 160 : index
    %c0_13 = arith.constant 0 : index
    %18 = vector.load %arg4[%c160, %c0_13] : memref<592x128xbf16, #tpu.memory_space<vmem>>, vector<128x128xbf16>
    %cst_14 = arith.constant dense<0.000000e+00> : vector<8x128xf32>
    %19 = tpu.matmul %17, %18, %cst_14 {dimension_numbers = #tpu.dot_dimension_numbers<[1], [0], [0], [1], [0, 0, 1, 1], [], []>} : vector<8x128xbf16>, vector<128x128xbf16>, vector<8x128xf32> -> vector<8x128xf32>
    %c288 = arith.constant 288 : index
    %c0_15 = arith.constant 0 : index
    %20 = vector.load %arg4[%c288, %c0_15] : memref<592x128xbf16, #tpu.memory_space<vmem>>, vector<1x128xbf16>
    %21 = arith.extf %20 : vector<1x128xbf16> to vector<1x128xf32>
    %22 = vector.broadcast %21 : vector<1x128xf32> to vector<8x128xf32>
    %23 = arith.addf %19, %22 : vector<8x128xf32>
    %cst_16 = arith.constant 0.000000e+00 : f32
    %24 = vector.broadcast %cst_16 : f32 to vector<8x128xf32>
    %25 = arith.maximumf %23, %24 : vector<8x128xf32>
    %26 = arith.truncf %25 : vector<8x128xf32> to vector<8x128xbf16>
    %c304 = arith.constant 304 : index
    %c0_17 = arith.constant 0 : index
    %27 = vector.load %arg4[%c304, %c0_17] : memref<592x128xbf16, #tpu.memory_space<vmem>>, vector<128x128xbf16>
    %cst_18 = arith.constant dense<0.000000e+00> : vector<8x128xf32>
    %28 = tpu.matmul %26, %27, %cst_18 {dimension_numbers = #tpu.dot_dimension_numbers<[1], [0], [0], [1], [0, 0, 1, 1], [], []>} : vector<8x128xbf16>, vector<128x128xbf16>, vector<8x128xf32> -> vector<8x128xf32>
    %c432 = arith.constant 432 : index
    %c0_19 = arith.constant 0 : index
    %29 = vector.load %arg4[%c432, %c0_19] : memref<592x128xbf16, #tpu.memory_space<vmem>>, vector<1x128xbf16>
    %30 = arith.extf %29 : vector<1x128xbf16> to vector<1x128xf32>
    %31 = vector.broadcast %30 : vector<1x128xf32> to vector<8x128xf32>
    %32 = arith.addf %28, %31 : vector<8x128xf32>
    %33 = arith.mulf %16, %32 : vector<8x128xf32>
    %34 = arith.truncf %33 : vector<8x128xf32> to vector<8x128xbf16>
    %c448 = arith.constant 448 : index
    %c0_20 = arith.constant 0 : index
    %35 = vector.load %arg4[%c448, %c0_20] : memref<592x128xbf16, #tpu.memory_space<vmem>>, vector<128x128xbf16>
    %cst_21 = arith.constant dense<0.000000e+00> : vector<8x128xf32>
    %36 = tpu.matmul %34, %35, %cst_21 {dimension_numbers = #tpu.dot_dimension_numbers<[1], [0], [0], [1], [0, 0, 1, 1], [], []>} : vector<8x128xbf16>, vector<128x128xbf16>, vector<8x128xf32> -> vector<8x128xf32>
    %c576 = arith.constant 576 : index
    %c0_22 = arith.constant 0 : index
    %37 = vector.load %arg4[%c576, %c0_22] : memref<592x128xbf16, #tpu.memory_space<vmem>>, vector<1x128xbf16>
    %38 = arith.extf %37 : vector<1x128xbf16> to vector<1x128xf32>
    %39 = vector.broadcast %38 : vector<1x128xf32> to vector<8x128xf32>
    %40 = arith.addf %36, %39 : vector<8x128xf32>
    %c0_23 = arith.constant 0 : index
    %c0_24 = arith.constant 0 : index
    %41 = vector.load %arg5[%c0_23, %c0_24] : memref<8x128xf32, #tpu.memory_space<vmem>>, vector<8x128xf32>
    tpu.vector_store %arg5[%c0_23, %c0_24], %40 {strides = array<i32>} : memref<8x128xf32, #tpu.memory_space<vmem>>, vector<8x128xf32>,
    return
  }
  func.func @transform_0(%arg0: i32) -> (i32, i32) {
    %c0_i32 = arith.constant 0 : i32
    %c0_i32_0 = arith.constant 0 : i32
    return %arg0, %c0_i32 : i32, i32
  }
  func.func @transform_1(%arg0: i32) -> (i32, i32) {
    %c0_i32 = arith.constant 0 : i32
    %c0_i32_0 = arith.constant 0 : i32
    return %arg0, %c0_i32 : i32, i32
  }
  func.func @transform_2(%arg0: i32) -> (i32, i32) {
    %c0_i32 = arith.constant 0 : i32
    %c0_i32_0 = arith.constant 0 : i32
    return %arg0, %c0_i32 : i32, i32
  }
  func.func @transform_3(%arg0: i32) -> (i32, i32) {
    %c0_i32 = arith.constant 0 : i32
    %c0_i32_0 = arith.constant 0 : i32
    %c0_i32_1 = arith.constant 0 : i32
    return %c0_i32, %c0_i32_0 : i32, i32
  }
  func.func @transform_4(%arg0: i32) -> (i32, i32) {
    %c0_i32 = arith.constant 0 : i32
    %c0_i32_0 = arith.constant 0 : i32
    return %arg0, %c0_i32 : i32, i32
  }
}

module attributes {stable_mosaic.version = 11 : i64} {
  func.func @kernel(%arg0: i32, %arg1: memref<8x32xbf16, #tpu.memory_space<vmem>>, %arg2: memref<8x48xbf16, #tpu.memory_space<vmem>>, %arg3: memref<8x64xbf16, #tpu.memory_space<vmem>>, %arg4: memref<592x128xbf16, #tpu.memory_space<vmem>>, %arg5: memref<8x128xf32, #tpu.memory_space<vmem>>) attributes {dimension_semantics = [#tpu.dimension_semantics<parallel>], iteration_bounds = array<i64: 1>, scalar_prefetch = 0 : i64, scratch_operands = 0 : i64, tpu.core_type = #tpu.core_type<tc>, window_params = [{transform_indices = @transform_0, window_bounds = array<i64: 8, 32>}, {transform_indices = @transform_1, window_bounds = array<i64: 8, 48>}, {transform_indices = @transform_2, window_bounds = array<i64: 8, 64>}, {pipeline_mode = #tpu.pipeline_mode<synchronous>, transform_indices = @transform_3, window_bounds = array<i64: 592, 128>}, {transform_indices = @transform_4, window_bounds = array<i64: 8, 128>}]} {
    %c0 = arith.constant 0 : index
    %c0_0 = arith.constant 0 : index
    %0 = vector.load %arg1[%c0, %c0_0] : memref<8x32xbf16, #tpu.memory_space<vmem>>, vector<8x32xbf16>
    %c0_1 = arith.constant 0 : index
    %c0_2 = arith.constant 0 : index
    %1 = vector.load %arg4[%c0_1, %c0_2] : memref<592x128xbf16, #tpu.memory_space<vmem>>, vector<32x128xbf16>
    %cst = arith.constant dense<0.000000e+00> : vector<8x128xf32>
    %2 = tpu.matmul %0, %1, %cst {dimension_numbers = #tpu.dot_dimension_numbers<[1], [0], [0], [1], [0, 0, 1, 1], [], []>} : vector<8x32xbf16>, vector<32x128xbf16>, vector<8x128xf32> -> vector<8x128xf32>
    %c0_3 = arith.constant 0 : index
    %c0_4 = arith.constant 0 : index
    %3 = vector.load %arg2[%c0_3, %c0_4] : memref<8x48xbf16, #tpu.memory_space<vmem>>, vector<8x48xbf16>
    %c32 = arith.constant 32 : index
    %c0_5 = arith.constant 0 : index
    %4 = vector.load %arg4[%c32, %c0_5] : memref<592x128xbf16, #tpu.memory_space<vmem>>, vector<48x128xbf16>
    %cst_6 = arith.constant dense<0.000000e+00> : vector<8x128xf32>
    %5 = tpu.matmul %3, %4, %cst_6 {dimension_numbers = #tpu.dot_dimension_numbers<[1], [0], [0], [1], [0, 0, 1, 1], [], []>} : vector<8x48xbf16>, vector<48x128xbf16>, vector<8x128xf32> -> vector<8x128xf32>
    %6 = arith.addf %2, %5 : vector<8x128xf32>
    %c0_7 = arith.constant 0 : index
    %c0_8 = arith.constant 0 : index
    %7 = vector.load %arg3[%c0_7, %c0_8] : memref<8x64xbf16, #tpu.memory_space<vmem>>, vector<8x64xbf16>
    %c80 = arith.constant 80 : index
    %c0_9 = arith.constant 0 : index
    %8 = vector.load %arg4[%c80, %c0_9] : memref<592x128xbf16, #tpu.memory_space<vmem>>, vector<64x128xbf16>
    %cst_10 = arith.constant dense<0.000000e+00> : vector<8x128xf32>
    %9 = tpu.matmul %7, %8, %cst_10 {dimension_numbers = #tpu.dot_dimension_numbers<[1], [0], [0], [1], [0, 0, 1, 1], [], []>} : vector<8x64xbf16>, vector<64x128xbf16>, vector<8x128xf32> -> vector<8x128xf32>
    %10 = arith.addf %6, %9 : vector<8x128xf32>
    %c144 = arith.constant 144 : index
    %c0_11 = arith.constant 0 : index
    %11 = vector.load %arg4[%c144, %c0_11] : memref<592x128xbf16, #tpu.memory_space<vmem>>, vector<1x128xbf16>
    %12 = arith.extf %11 : vector<1x128xbf16> to vector<1x128xf32>
    %13 = vector.broadcast %12 : vector<1x128xf32> to vector<8x128xf32>
    %14 = arith.addf %10, %13 : vector<8x128xf32>
    %cst_12 = arith.constant 0.000000e+00 : f32
    %15 = vector.broadcast %cst_12 : f32 to vector<8x128xf32>
    %16 = arith.maximumf %14, %15 : vector<8x128xf32>
    %17 = arith.truncf %16 : vector<8x128xf32> to vector<8x128xbf16>
    %c160 = arith.constant 160 : index
    %c0_13 = arith.constant 0 : index
    %18 = vector.load %arg4[%c160, %c0_13] : memref<592x128xbf16, #tpu.memory_space<vmem>>, vector<128x128xbf16>
    %cst_14 = arith.constant dense<0.000000e+00> : vector<8x128xf32>
    %19 = tpu.matmul %17, %18, %cst_14 {dimension_numbers = #tpu.dot_dimension_numbers<[1], [0], [0], [1], [0, 0, 1, 1], [], []>} : vector<8x128xbf16>, vector<128x128xbf16>, vector<8x128xf32> -> vector<8x128xf32>
    %c288 = arith.constant 288 : index
    %c0_15 = arith.constant 0 : index
    %20 = vector.load %arg4[%c288, %c0_15] : memref<592x128xbf16, #tpu.memory_space<vmem>>, vector<1x128xbf16>
    %21 = arith.extf %20 : vector<1x128xbf16> to vector<1x128xf32>
    %22 = vector.broadcast %21 : vector<1x128xf32> to vector<8x128xf32>
    %23 = arith.addf %19, %22 : vector<8x128xf32>
    %cst_16 = arith.constant 0.000000e+00 : f32
    %24 = vector.broadcast %cst_16 : f32 to vector<8x128xf32>
    %25 = arith.maximumf %23, %24 : vector<8x128xf32>
    %26 = arith.truncf %25 : vector<8x128xf32> to vector<8x128xbf16>
    %c304 = arith.constant 304 : index
    %c0_17 = arith.constant 0 : index
    %27 = vector.load %arg4[%c304, %c0_17] : memref<592x128xbf16, #tpu.memory_space<vmem>>, vector<128x128xbf16>
    %cst_18 = arith.constant dense<0.000000e+00> : vector<8x128xf32>
    %28 = tpu.matmul %26, %27, %cst_18 {dimension_numbers = #tpu.dot_dimension_numbers<[1], [0], [0], [1], [0, 0, 1, 1], [], []>} : vector<8x128xbf16>, vector<128x128xbf16>, vector<8x128xf32> -> vector<8x128xf32>
    %c432 = arith.constant 432 : index
    %c0_19 = arith.constant 0 : index
    %29 = vector.load %arg4[%c432, %c0_19] : memref<592x128xbf16, #tpu.memory_space<vmem>>, vector<1x128xbf16>
    %30 = arith.extf %29 : vector<1x128xbf16> to vector<1x128xf32>
    %31 = vector.broadcast %30 : vector<1x128xf32> to vector<8x128xf32>
    %32 = arith.addf %28, %31 : vector<8x128xf32>
    %33 = arith.mulf %16, %32 : vector<8x128xf32>
    %34 = arith.truncf %33 : vector<8x128xf32> to vector<8x128xbf16>
    %c448 = arith.constant 448 : index
    %c0_20 = arith.constant 0 : index
    %35 = vector.load %arg4[%c448, %c0_20] : memref<592x128xbf16, #tpu.memory_space<vmem>>, vector<128x128xbf16>
    %cst_21 = arith.constant dense<0.000000e+00> : vector<8x128xf32>
    %36 = tpu.matmul %34, %35, %cst_21 {dimension_numbers = #tpu.dot_dimension_numbers<[1], [0], [0], [1], [0, 0, 1, 1], [], []>} : vector<8x128xbf16>, vector<128x128xbf16>, vector<8x128xf32> -> vector<8x128xf32>
    %c576 = arith.constant 576 : index
    %c0_22 = arith.constant 0 : index
    %37 = vector.load %arg4[%c576, %c0_22] : memref<592x128xbf16, #tpu.memory_space<vmem>>, vector<1x128xbf16>
    %38 = arith.extf %37 : vector<1x128xbf16> to vector<1x128xf32>
    %39 = vector.broadcast %38 : vector<1x128xf32> to vector<8x128xf32>
    %40 = arith.addf %36, %39 : vector<8x128xf32>
    %c0_23 = arith.constant 0 : index
    %c0_24 = arith.constant 0 : index
    %41 = vector.load %arg5[%c0_23, %c0_24] : memref<8x128xf32, #tpu.memory_space<vmem>>, vector<8x128xf32>
    tpu.vector_store %arg5[%c0_23, %c0_24], %40 {strides = array<i32>} : memref<8x128xf32, #tpu.memory_space<vmem>>, vector<8x128xf32>,
    return
  }
  func.func @transform_0(%arg0: i32) -> (i32, i32) {
    %c0_i32 = arith.constant 0 : i32
    %c0_i32_0 = arith.constant 0 : i32
    return %arg0, %c0_i32 : i32, i32
  }
  func.func @transform_1(%arg0: i32) -> (i32, i32) {
    %c0_i32 = arith.constant 0 : i32
    %c0_i32_0 = arith.constant 0 : i32
    return %arg0, %c0_i32 : i32, i32
  }
  func.func @transform_2(%arg0: i32) -> (i32, i32) {
    %c0_i32 = arith.constant 0 : i32
    %c0_i32_0 = arith.constant 0 : i32
    return %arg0, %c0_i32 : i32, i32
  }
  func.func @transform_3(%arg0: i32) -> (i32, i32) {
    %c0_i32 = arith.constant 0 : i32
    %c0_i32_0 = arith.constant 0 : i32
    %c0_i32_1 = arith.constant 0 : i32
    return %c0_i32, %c0_i32_0 : i32, i32
  }
  func.func @transform_4(%arg0: i32) -> (i32, i32) {
    %c0_i32 = arith.constant 0 : i32
    %c0_i32_0 = arith.constant 0 : i32
    return %arg0, %c0_i32 : i32, i32
  }
}

</mosaic_0001>

<llo_original>
// kernel: tpu_custom_call.1
$region0: #{tpu_custom_call.1}
  #allocation0 [shape = 'u32[]', space=smem, size = 0x4, offset = 0x4, fixed_abs, tag = 'smem constant byte address 0x4 - core index']
  #allocation1 [shape = 'u32[72,128]{1,0:T(1,128)}', space=vmem, size = 0x9000, scoped, tag = 'internal scratch']
  %s0 = inlined_call_operand.hbm [shape: bf16[8,32], index: 0, kind: input, shape index: {}]
  %s1 = inlined_call_operand.hbm [shape: bf16[8,48], index: 1, kind: input, shape index: {}]
  %s2 = inlined_call_operand.hbm [shape: bf16[8,64], index: 2, kind: input, shape index: {}]
  %s3 = inlined_call_operand.hbm [shape: bf16[592,128], index: 3, kind: input, shape index: {}]
  %s4 = inlined_call_operand.hbm [shape: f32[8,128], index: 4, kind: output, shape index: {}]
  %s5 = sld [smem:[#allocation0]]
  $region42: #{tpu_custom_call.1} parent=0
    _
  %s7 = ssub.s32 1, %s5
  %s8 = scalar_select 0, %s7, %s5
  $region1: #{tpu_custom_call.1} parent=0
    #allocation2 [shape = 'u8[2048]{0}', space=vmem, size = 0x800, scoped, tag = 'input window, operand 0, single buffered']
    #allocation3 [shape = 's32[1]{0}', space=sflag, size = 0x4, scoped, tag = 'scoped memory for tpu_custom_call.1']
    #allocation4 [shape = 's32[1]{0}', space=sflag, size = 0x4, scoped, tag = 'scoped memory for tpu_custom_call.1']
    #allocation5 [shape = 'u8[2048]{0}', space=vmem, size = 0x800, scoped, tag = 'input window, operand 1, single buffered']
    #allocation6 [shape = 's32[1]{0}', space=sflag, size = 0x4, scoped, tag = 'scoped memory for tpu_custom_call.1']
    #allocation7 [shape = 'u8[2048]{0}', space=vmem, size = 0x800, scoped, tag = 'input window, operand 2, single buffered']
    #allocation8 [shape = 'u8[151552]{0}', space=vmem, size = 0x25000, scoped, tag = 'input window, operand 3, single buffered']
    #allocation9 [shape = 's32[1]{0}', space=sflag, size = 0x4, scoped, tag = 'scoped memory for tpu_custom_call.1']
    #allocation10 [shape = 'u8[4096]{0}', space=vmem, size = 0x1000, scoped, tag = 'output window, operand 0, single buffered']
    %9 = vsyncpa [#allocation3], 0
    %10 = vsyncpa [#allocation6], 0
    %11 = vsyncpa [#allocation9], 0
    %12 = vsyncpa [#allocation4], 0
    // Predicated region
    $region2: #{tpu_custom_call.1} parent=1 // pred_check
      _
    $region3: #{tpu_custom_call.1} parent=1 // pred_check_branch
      %14 = sbr.rel (0) target = $region5
    $region4: #{tpu_custom_call.1} parent=1 // pred_region
      %16 = vsyncadd [#allocation3], 0
      %s18 = sshll.u32 %s0, 4
      %s19 = int_to_ptr.hbm [resolvable:$true] %s18
      %s20 = sshll.u32 [#allocation2], 4
      %s21 = int_to_ptr.vmem [resolvable:$true] %s20
      %23 = dma.hbm_to_vmem [thread:$0]  %s19, 64, %s21, [#allocation3]
    $region5: #{tpu_custom_call.1} parent=1 // pred_fallthru
      _
    // Predicated region
    $region6: #{tpu_custom_call.1} parent=1 // pred_check
      _
    $region7: #{tpu_custom_call.1} parent=1 // pred_check_branch
      %25 = sbr.rel (0) target = $region9
    $region8: #{tpu_custom_call.1} parent=1 // pred_region
      %27 = vsyncadd [#allocation6], 0
      %s29 = sshll.u32 %s1, 4
      %s30 = int_to_ptr.hbm [resolvable:$true] %s29
      %s31 = sshll.u32 [#allocation5], 4
      %s32 = int_to_ptr.vmem [resolvable:$true] %s31
      %34 = dma.hbm_to_vmem [thread:$0]  %s30, 64, %s32, [#allocation6]
    $region9: #{tpu_custom_call.1} parent=1 // pred_fallthru
      _
    // Predicated region
    $region10: #{tpu_custom_call.1} parent=1 // pred_check
      _
    $region11: #{tpu_custom_call.1} parent=1 // pred_check_branch
      %36 = sbr.rel (0) target = $region13
    $region12: #{tpu_custom_call.1} parent=1 // pred_region
      %38 = vsyncadd [#allocation6], 0
      %s40 = sshll.u32 %s2, 4
      %s41 = int_to_ptr.hbm [resolvable:$true] %s40
      %s42 = sshll.u32 [#allocation7], 4
      %s43 = int_to_ptr.vmem [resolvable:$true] %s42
      %45 = dma.hbm_to_vmem [thread:$0]  %s41, 64, %s43, [#allocation6]
    $region13: #{tpu_custom_call.1} parent=1 // pred_fallthru
      _
    // Predicated region
    $region14: #{tpu_custom_call.1} parent=1 // pred_check
      _
    $region15: #{tpu_custom_call.1} parent=1 // pred_check_branch
      %47 = sbr.rel (0) target = $region17
    $region16: #{tpu_custom_call.1} parent=1 // pred_region
      %49 = vsyncadd [#allocation9], 0
      %s50 = sshll.u32 %s3, 4
      %s51 = int_to_ptr.hbm [resolvable:$true] %s50
      %s52 = sshll.u32 [#allocation8], 4
      %s53 = int_to_ptr.vmem [resolvable:$true] %s52
      %58 = dma.hbm_to_vmem [thread:$0]  %s51, 4736, %s53, [#allocation9], 64, 64, 4
    $region17: #{tpu_custom_call.1} parent=1 // pred_fallthru
      _
    // Predicated region
    $region18: #{tpu_custom_call.1} parent=1 // pred_check
      _
    $region19: #{tpu_custom_call.1} parent=1 // pred_check_branch
      %60 = sbr.rel (0) target = $region21
    $region20: #{tpu_custom_call.1} parent=1 // pred_region
      %62 = dma.done [#allocation3], 64
    $region21: #{tpu_custom_call.1} parent=1 // pred_fallthru
      _
    // Predicated region
    $region22: #{tpu_custom_call.1} parent=1 // pred_check
      _
    $region23: #{tpu_custom_call.1} parent=1 // pred_check_branch
      %64 = sbr.rel (0) target = $region25
    $region24: #{tpu_custom_call.1} parent=1 // pred_region
      %66 = dma.done [#allocation6], 64
    $region25: #{tpu_custom_call.1} parent=1 // pred_fallthru
      _
    // Predicated region
    $region26: #{tpu_custom_call.1} parent=1 // pred_check
      _
    $region27: #{tpu_custom_call.1} parent=1 // pred_check_branch
      %68 = sbr.rel (0) target = $region29
    $region28: #{tpu_custom_call.1} parent=1 // pred_region
      %70 = dma.done [#allocation6], 64
    $region29: #{tpu_custom_call.1} parent=1 // pred_fallthru
      _
    // Predicated region
    $region30: #{tpu_custom_call.1} parent=1 // pred_check
      _
    $region31: #{tpu_custom_call.1} parent=1 // pred_check_branch
      %72 = sbr.rel (0) target = $region33
    $region32: #{tpu_custom_call.1} parent=1 // pred_region
      %74 = dma.done [#allocation9], 4736
    $region33: #{tpu_custom_call.1} parent=1 // pred_fallthru
      _
    %v76 = vld [vmem:[#allocation2] sm:$0xf]
    %v77 = vld [vmem:[#allocation8] sm:$0xf]
    %v78 = vld [vmem:[#allocation8 + $0x4] sm:$0xf]
    %v79 = vld [vmem:[#allocation8 + $0x8] sm:$0xf]
    %v80 = vld [vmem:[#allocation8 + $0xc] sm:$0xf]
    %v81 = vld [vmem:[#allocation5] sm:$0xf]
    %v82 = vld [vmem:[#allocation8 + $0x10] sm:$0xf]
    %v83 = vld [vmem:[#allocation8 + $0x14] sm:$0xf]
    %v84 = vld [vmem:[#allocation8 + $0x18] sm:$0xf]
    %v85 = vld [vmem:[#allocation8 + $0x1c] sm:$0xf]
    %v86 = vld [vmem:[#allocation8 + $0x20] sm:$0xf]
    %v87 = vld [vmem:[#allocation8 + $0x24] sm:$0xf]
    %v94 = vunpack.c.l.b16 %v82
    %v95 = vunpack.c.l.b16 %v83
    %v96 = vunpack.c.l.b16 %v84
    %v97 = vunpack.c.l.b16 %v85
    %v98 = vunpack.c.l.b16 %v86
    %v99 = vunpack.c.l.b16 %v87
    %v100 = vpack.c.b16 %v95, %v94
    %v101 = vpack.c.b16 %v97, %v96
    %v102 = vpack.c.b16 %v99, %v98
    %vm106 = vcmask 392192
    %v108 = vsel %vm106, %v81, 0
    %110 = vmatpush.bf16.msra.mxu0 0
    %111 = vmatpush.bf16.msra.mxu0 0
    %112 = vmatpush.bf16.msra.mxu0 0
    %113 = vmatpush.bf16.msra.mxu0 0
    %114 = vmatpush.bf16.msra.mxu0 0
    %115 = vmatpush.bf16.msra.mxu0 %v102
    %116 = vmatpush.bf16.msra.mxu0 %v101
    %117 = vmatpush.bf16.msra.mxu0 %v100
    %118 = vmatmul.bf16.gmra.mxu0 %v108
    %v119 = vpop.f32.mrf.mxu0
    %v120 = vadd.f32 0.0, %v119
    %v121 = vpop.f32.mrf.mxu0
    %122 = vdwg.mxu0
    %v127 = vunpack.c.l.b16 %v77
    %v128 = vunpack.c.l.b16 %v78
    %v129 = vunpack.c.l.b16 %v79
    %v130 = vunpack.c.l.b16 %v80
    %v131 = vpack.c.b16 %v128, %v127
    %v132 = vpack.c.b16 %v130, %v129
    %vm135 = vcmask 261120
    %v137 = vsel %vm135, %v76, 0
    %139 = vmatpush.bf16.msra.mxu0 0
    %140 = vmatpush.bf16.msra.mxu0 0
    %141 = vmatpush.bf16.msra.mxu0 0
    %142 = vmatpush.bf16.msra.mxu0 0
    %143 = vmatpush.bf16.msra.mxu0 0
    %144 = vmatpush.bf16.msra.mxu0 0
    %145 = vmatpush.bf16.msra.mxu0 %v132
    %146 = vmatpush.bf16.msra.mxu0 %v131
    %147 = vmatmul.bf16.gmra.mxu0 %v137
    %v148 = vpop.f32.mrf.mxu0
    %v149 = vadd.f32 %v120, %v148
    %v150 = vpop.f32.mrf.mxu0
    %151 = vdwg.mxu0
    %v152 = vld [vmem:[#allocation7] sm:$0xf]
    %v153 = vld [vmem:[#allocation8 + $0x28] sm:$0xf]
    %v154 = vld [vmem:[#allocation8 + $0x2c] sm:$0xf]
    %v155 = vld [vmem:[#allocation8 + $0x30] sm:$0xf]
    %v156 = vld [vmem:[#allocation8 + $0x34] sm:$0xf]
    %v157 = vld [vmem:[#allocation8 + $0x38] sm:$0xf]
    %v158 = vld [vmem:[#allocation8 + $0x3c] sm:$0xf]
    %v159 = vld [vmem:[#allocation8 + $0x40] sm:$0xf]
    %v160 = vld [vmem:[#allocation8 + $0x44] sm:$0xf]
    %v169 = vunpack.c.l.b16 %v153
    %v170 = vunpack.c.l.b16 %v154
    %v171 = vunpack.c.l.b16 %v155
    %v172 = vunpack.c.l.b16 %v156
    %v173 = vunpack.c.l.b16 %v157
    %v174 = vunpack.c.l.b16 %v158
    %v175 = vunpack.c.l.b16 %v159
    %v176 = vunpack.c.l.b16 %v160
    %v177 = vpack.c.b16 %v170, %v169
    %v178 = vpack.c.b16 %v172, %v171
    %v179 = vpack.c.b16 %v174, %v173
    %v180 = vpack.c.b16 %v176, %v175
    %vm185 = vcmask 523264
    %v187 = vsel %vm185, %v152, 0
    %189 = vmatpush.bf16.msra.mxu0 0
    %190 = vmatpush.bf16.msra.mxu0 0
    %191 = vmatpush.bf16.msra.mxu0 0
    %192 = vmatpush.bf16.msra.mxu0 0
    %193 = vmatpush.bf16.msra.mxu0 %v180
    %194 = vmatpush.bf16.msra.mxu0 %v179
    %195 = vmatpush.bf16.msra.mxu0 %v178
    %196 = vmatpush.bf16.msra.mxu0 %v177
    %197 = vmatmul.bf16.gmra.mxu0 %v187
    %v198 = vpop.f32.mrf.mxu0
    %v199 = vadd.f32 0.0, %v198
    %v200 = vpop.f32.mrf.mxu0
    %201 = vdwg.mxu0
    %v202 = vadd.f32 %v149, %v199
    %v203 = vld [vmem:[#allocation8 + $0x48] sm:$0x1]
    %v204 = vunpack.c.l.bf16 %v203
    %v205 = vperm.slane %v204, 0
    %v206 = vadd.f32 %v202, %v205
    %v207 = vmax.f32 %v206, 0.0
    %v208 = vpack.c.bf16 %v207, %v207
    %v209 = vld [vmem:[#allocation8 + $0x50] sm:$0xf]
    %v210 = vld [vmem:[#allocation8 + $0x54] sm:$0xf]
    %v211 = vld [vmem:[#allocation8 + $0x58] sm:$0xf]
    %v212 = vld [vmem:[#allocation8 + $0x5c] sm:$0xf]
    %v213 = vld [vmem:[#allocation8 + $0x60] sm:$0xf]
    %v214 = vld [vmem:[#allocation8 + $0x64] sm:$0xf]
    %v215 = vld [vmem:[#allocation8 + $0x68] sm:$0xf]
    %v216 = vld [vmem:[#allocation8 + $0x6c] sm:$0xf]
    %v217 = vld [vmem:[#allocation8 + $0x70] sm:$0xf]
    %v218 = vld [vmem:[#allocation8 + $0x74] sm:$0xf]
    %v219 = vld [vmem:[#allocation8 + $0x78] sm:$0xf]
    %v220 = vld [vmem:[#allocation8 + $0x7c] sm:$0xf]
    %v221 = vld [vmem:[#allocation8 + $0x80] sm:$0xf]
    %v222 = vld [vmem:[#allocation8 + $0x84] sm:$0xf]
    %v223 = vld [vmem:[#allocation8 + $0x88] sm:$0xf]
    %v224 = vld [vmem:[#allocation8 + $0x8c] sm:$0xf]
    %v225 = vld [vmem:[#allocation8 + $0x90] sm:$0x1]
    %v226 = vunpack.c.l.bf16 %v225
    %v227 = vperm.slane %v226, 0
    %v244 = vunpack.c.l.b16 %v209
    %v245 = vunpack.c.l.b16 %v210
    %v246 = vunpack.c.l.b16 %v211
    %v247 = vunpack.c.l.b16 %v212
    %v248 = vunpack.c.l.b16 %v213
    %v249 = vunpack.c.l.b16 %v214
    %v250 = vunpack.c.l.b16 %v215
    %v251 = vunpack.c.l.b16 %v216
    %v252 = vunpack.c.l.b16 %v217
    %v253 = vunpack.c.l.b16 %v218
    %v254 = vunpack.c.l.b16 %v219
    %v255 = vunpack.c.l.b16 %v220
    %v256 = vunpack.c.l.b16 %v221
    %v257 = vunpack.c.l.b16 %v222
    %v258 = vunpack.c.l.b16 %v223
    %v259 = vunpack.c.l.b16 %v224
    %v260 = vpack.c.b16 %v245, %v244
    %v261 = vpack.c.b16 %v247, %v246
    %v262 = vpack.c.b16 %v249, %v248
    %v263 = vpack.c.b16 %v251, %v250
    %v264 = vpack.c.b16 %v253, %v252
    %v265 = vpack.c.b16 %v255, %v254
    %v266 = vpack.c.b16 %v257, %v256
    %v267 = vpack.c.b16 %v259, %v258
    %276 = vmatpush.bf16.msra.mxu0 %v267
    %277 = vmatpush.bf16.msra.mxu0 %v266
    %278 = vmatpush.bf16.msra.mxu0 %v265
    %279 = vmatpush.bf16.msra.mxu0 %v264
    %280 = vmatpush.bf16.msra.mxu0 %v263
    %281 = vmatpush.bf16.msra.mxu0 %v262
    %282 = vmatpush.bf16.msra.mxu0 %v261
    %283 = vmatpush.bf16.msra.mxu0 %v260
    %284 = vmatmul.bf16.gmra.mxu0 %v208
    %v285 = vpop.f32.mrf.mxu0
    %v286 = vadd.f32 %v227, %v285
    %v287 = vpop.f32.mrf.mxu0
    %288 = vdwg.mxu0
    %v289 = vmax.f32 %v286, 0.0
    %v290 = vpack.c.bf16 %v289, %v289
    %v291 = vld [vmem:[#allocation8 + $0x98] sm:$0xf]
    %v292 = vld [vmem:[#allocation8 + $0x9c] sm:$0xf]
    %v293 = vld [vmem:[#allocation8 + $0xa0] sm:$0xf]
    %v294 = vld [vmem:[#allocation8 + $0xa4] sm:$0xf]
    %v295 = vld [vmem:[#allocation8 + $0xa8] sm:$0xf]
    %v296 = vld [vmem:[#allocation8 + $0xac] sm:$0xf]
    %v297 = vld [vmem:[#allocation8 + $0xb0] sm:$0xf]
    %v298 = vld [vmem:[#allocation8 + $0xb4] sm:$0xf]
    %v299 = vld [vmem:[#allocation8 + $0xb8] sm:$0xf]
    %v300 = vld [vmem:[#allocation8 + $0xbc] sm:$0xf]
    %v301 = vld [vmem:[#allocation8 + $0xc0] sm:$0xf]
    %v302 = vld [vmem:[#allocation8 + $0xc4] sm:$0xf]
    %v303 = vld [vmem:[#allocation8 + $0xc8] sm:$0xf]
    %v304 = vld [vmem:[#allocation8 + $0xcc] sm:$0xf]
    %v305 = vld [vmem:[#allocation8 + $0xd0] sm:$0xf]
    %v306 = vld [vmem:[#allocation8 + $0xd4] sm:$0xf]
    %v307 = vld [vmem:[#allocation8 + $0xd8] sm:$0x1]
    %v308 = vunpack.c.l.bf16 %v307
    %v309 = vperm.slane %v308, 0
    %v326 = vunpack.c.l.b16 %v291
    %v327 = vunpack.c.l.b16 %v292
    %v328 = vunpack.c.l.b16 %v293
    %v329 = vunpack.c.l.b16 %v294
    %v330 = vunpack.c.l.b16 %v295
    %v331 = vunpack.c.l.b16 %v296
    %v332 = vunpack.c.l.b16 %v297
    %v333 = vunpack.c.l.b16 %v298
    %v334 = vunpack.c.l.b16 %v299
    %v335 = vunpack.c.l.b16 %v300
    %v336 = vunpack.c.l.b16 %v301
    %v337 = vunpack.c.l.b16 %v302
    %v338 = vunpack.c.l.b16 %v303
    %v339 = vunpack.c.l.b16 %v304
    %v340 = vunpack.c.l.b16 %v305
    %v341 = vunpack.c.l.b16 %v306
    %v342 = vpack.c.b16 %v327, %v326
    %v343 = vpack.c.b16 %v329, %v328
    %v344 = vpack.c.b16 %v331, %v330
    %v345 = vpack.c.b16 %v333, %v332
    %v346 = vpack.c.b16 %v335, %v334
    %v347 = vpack.c.b16 %v337, %v336
    %v348 = vpack.c.b16 %v339, %v338
    %v349 = vpack.c.b16 %v341, %v340
    %358 = vmatpush.bf16.msra.mxu0 %v349
    %359 = vmatpush.bf16.msra.mxu0 %v348
    %360 = vmatpush.bf16.msra.mxu0 %v347
    %361 = vmatpush.bf16.msra.mxu0 %v346
    %362 = vmatpush.bf16.msra.mxu0 %v345
    %363 = vmatpush.bf16.msra.mxu0 %v344
    %364 = vmatpush.bf16.msra.mxu0 %v343
    %365 = vmatpush.bf16.msra.mxu0 %v342
    %366 = vmatmul.bf16.gmra.mxu0 %v290
    %v367 = vpop.f32.mrf.mxu0
    %v368 = vadd.f32 %v309, %v367
    %v369 = vpop.f32.mrf.mxu0
    %370 = vdwg.mxu0
    %v371 = vmul.f32 %v207, %v368
    %v372 = vpack.c.bf16 %v371, %v371
    %v373 = vld [vmem:[#allocation8 + $0xe0] sm:$0xf]
    %v374 = vld [vmem:[#allocation8 + $0xe4] sm:$0xf]
    %v375 = vld [vmem:[#allocation8 + $0xe8] sm:$0xf]
    %v376 = vld [vmem:[#allocation8 + $0xec] sm:$0xf]
    %v377 = vld [vmem:[#allocation8 + $0xf0] sm:$0xf]
    %v378 = vld [vmem:[#allocation8 + $0xf4] sm:$0xf]
    %v379 = vld [vmem:[#allocation8 + $0xf8] sm:$0xf]
    %v380 = vld [vmem:[#allocation8 + $0xfc] sm:$0xf]
    %v381 = vld [vmem:[#allocation8 + $0x100] sm:$0xf]
    %v382 = vld [vmem:[#allocation8 + $0x104] sm:$0xf]
    %v383 = vld [vmem:[#allocation8 + $0x108] sm:$0xf]
    %v384 = vld [vmem:[#allocation8 + $0x10c] sm:$0xf]
    %v385 = vld [vmem:[#allocation8 + $0x110] sm:$0xf]
    %v386 = vld [vmem:[#allocation8 + $0x114] sm:$0xf]
    %v387 = vld [vmem:[#allocation8 + $0x118] sm:$0xf]
    %v388 = vld [vmem:[#allocation8 + $0x11c] sm:$0xf]
    %v389 = vld [vmem:[#allocation8 + $0x120] sm:$0x1]
    %v390 = vunpack.c.l.bf16 %v389
    %v391 = vperm.slane %v390, 0
    %v408 = vunpack.c.l.b16 %v373
    %v409 = vunpack.c.l.b16 %v374
    %v410 = vunpack.c.l.b16 %v375
    %v411 = vunpack.c.l.b16 %v376
    %v412 = vunpack.c.l.b16 %v377
    %v413 = vunpack.c.l.b16 %v378
    %v414 = vunpack.c.l.b16 %v379
    %v415 = vunpack.c.l.b16 %v380
    %v416 = vunpack.c.l.b16 %v381
    %v417 = vunpack.c.l.b16 %v382
    %v418 = vunpack.c.l.b16 %v383
    %v419 = vunpack.c.l.b16 %v384
    %v420 = vunpack.c.l.b16 %v385
    %v421 = vunpack.c.l.b16 %v386
    %v422 = vunpack.c.l.b16 %v387
    %v423 = vunpack.c.l.b16 %v388
    %v424 = vpack.c.b16 %v409, %v408
    %v425 = vpack.c.b16 %v411, %v410
    %v426 = vpack.c.b16 %v413, %v412
    %v427 = vpack.c.b16 %v415, %v414
    %v428 = vpack.c.b16 %v417, %v416
    %v429 = vpack.c.b16 %v419, %v418
    %v430 = vpack.c.b16 %v421, %v420
    %v431 = vpack.c.b16 %v423, %v422
    %440 = vmatpush.bf16.msra.mxu0 %v431
    %441 = vmatpush.bf16.msra.mxu0 %v430
    %442 = vmatpush.bf16.msra.mxu0 %v429
    %443 = vmatpush.bf16.msra.mxu0 %v428
    %444 = vmatpush.bf16.msra.mxu0 %v427
    %445 = vmatpush.bf16.msra.mxu0 %v426
    %446 = vmatpush.bf16.msra.mxu0 %v425
    %447 = vmatpush.bf16.msra.mxu0 %v424
    %448 = vmatmul.bf16.gmra.mxu0 %v372
    %v449 = vpop.f32.mrf.mxu0
    %v450 = vadd.f32 %v391, %v449
    %v451 = vpop.f32.mrf.mxu0
    %452 = vdwg.mxu0
    %453 = vst [vmem:[#allocation10] sm:$0xff] %v450
    // Predicated region
    $region34: #{tpu_custom_call.1} parent=1 // pred_check
      _
    $region35: #{tpu_custom_call.1} parent=1 // pred_check_branch
      %455 = sbr.rel (0) target = $region37
    $region36: #{tpu_custom_call.1} parent=1 // pred_region
      %457 = vsyncadd [#allocation4], 0
      %s459 = sshll.u32 [#allocation10], 4
      %s460 = int_to_ptr.vmem [resolvable:$true] %s459
      %s461 = sshll.u32 %s4, 4
      %s462 = int_to_ptr.hbm [resolvable:$true] %s461
      %464 = dma.vmem_to_hbm [thread:$0]  %s460, 128, %s462, [#allocation4]
    $region37: #{tpu_custom_call.1} parent=1 // pred_fallthru
      _
    // Predicated region
    $region38: #{tpu_custom_call.1} parent=1 // pred_check
      _
    $region39: #{tpu_custom_call.1} parent=1 // pred_check_branch
      %466 = sbr.rel (0) target = $region41
    $region40: #{tpu_custom_call.1} parent=1 // pred_region
      %468 = dma.done [#allocation4], 128
    $region41: #{tpu_custom_call.1} parent=1 // pred_fallthru
      _
    %469 = vsyncpa [#allocation3], 1
    %470 = vsyncpa [#allocation6], 1
    %471 = vsyncpa [#allocation9], 1
    %472 = vsyncpa [#allocation4], 1

// kernel: tpu_custom_call.1
$region0: #{tpu_custom_call.1}
  #allocation0 [shape = 'u32[]', space=smem, size = 0x4, offset = 0x4, fixed_abs, tag = 'smem constant byte address 0x4 - core index']
  #allocation1 [shape = 'u32[72,128]{1,0:T(1,128)}', space=vmem, size = 0x9000, scoped, tag = 'internal scratch']
  %s0 = inlined_call_operand.hbm [shape: bf16[8,32], index: 0, kind: input, shape index: {}]
  %s1 = inlined_call_operand.hbm [shape: bf16[8,48], index: 1, kind: input, shape index: {}]
  %s2 = inlined_call_operand.hbm [shape: bf16[8,64], index: 2, kind: input, shape index: {}]
  %s3 = inlined_call_operand.hbm [shape: bf16[592,128], index: 3, kind: input, shape index: {}]
  %s4 = inlined_call_operand.hbm [shape: f32[8,128], index: 4, kind: output, shape index: {}]
  %s5 = sld [smem:[#allocation0]]
  $region42: #{tpu_custom_call.1} parent=0
    _
  %s7 = ssub.s32 1, %s5
  %s8 = scalar_select 0, %s7, %s5
  $region1: #{tpu_custom_call.1} parent=0
    #allocation2 [shape = 'u8[2048]{0}', space=vmem, size = 0x800, scoped, tag = 'input window, operand 0, single buffered']
    #allocation3 [shape = 's32[1]{0}', space=sflag, size = 0x4, scoped, tag = 'scoped memory for tpu_custom_call.1']
    #allocation4 [shape = 's32[1]{0}', space=sflag, size = 0x4, scoped, tag = 'scoped memory for tpu_custom_call.1']
    #allocation5 [shape = 'u8[2048]{0}', space=vmem, size = 0x800, scoped, tag = 'input window, operand 1, single buffered']
    #allocation6 [shape = 's32[1]{0}', space=sflag, size = 0x4, scoped, tag = 'scoped memory for tpu_custom_call.1']
    #allocation7 [shape = 'u8[2048]{0}', space=vmem, size = 0x800, scoped, tag = 'input window, operand 2, single buffered']
    #allocation8 [shape = 'u8[151552]{0}', space=vmem, size = 0x25000, scoped, tag = 'input window, operand 3, single buffered']
    #allocation9 [shape = 's32[1]{0}', space=sflag, size = 0x4, scoped, tag = 'scoped memory for tpu_custom_call.1']
    #allocation10 [shape = 'u8[4096]{0}', space=vmem, size = 0x1000, scoped, tag = 'output window, operand 0, single buffered']
    %9 = vsyncpa [#allocation3], 0
    %10 = vsyncpa [#allocation6], 0
    %11 = vsyncpa [#allocation9], 0
    %12 = vsyncpa [#allocation4], 0
    // Predicated region
    $region2: #{tpu_custom_call.1} parent=1 // pred_check
      _
    $region3: #{tpu_custom_call.1} parent=1 // pred_check_branch
      %14 = sbr.rel (0) target = $region5
    $region4: #{tpu_custom_call.1} parent=1 // pred_region
      %16 = vsyncadd [#allocation3], 0
      %s18 = sshll.u32 %s0, 4
      %s19 = int_to_ptr.hbm [resolvable:$true] %s18
      %s20 = sshll.u32 [#allocation2], 4
      %s21 = int_to_ptr.vmem [resolvable:$true] %s20
      %23 = dma.hbm_to_vmem [thread:$0]  %s19, 64, %s21, [#allocation3]
    $region5: #{tpu_custom_call.1} parent=1 // pred_fallthru
      _
    // Predicated region
    $region6: #{tpu_custom_call.1} parent=1 // pred_check
      _
    $region7: #{tpu_custom_call.1} parent=1 // pred_check_branch
      %25 = sbr.rel (0) target = $region9
    $region8: #{tpu_custom_call.1} parent=1 // pred_region
      %27 = vsyncadd [#allocation6], 0
      %s29 = sshll.u32 %s1, 4
      %s30 = int_to_ptr.hbm [resolvable:$true] %s29
      %s31 = sshll.u32 [#allocation5], 4
      %s32 = int_to_ptr.vmem [resolvable:$true] %s31
      %34 = dma.hbm_to_vmem [thread:$0]  %s30, 64, %s32, [#allocation6]
    $region9: #{tpu_custom_call.1} parent=1 // pred_fallthru
      _
    // Predicated region
    $region10: #{tpu_custom_call.1} parent=1 // pred_check
      _
    $region11: #{tpu_custom_call.1} parent=1 // pred_check_branch
      %36 = sbr.rel (0) target = $region13
    $region12: #{tpu_custom_call.1} parent=1 // pred_region
      %38 = vsyncadd [#allocation6], 0
      %s40 = sshll.u32 %s2, 4
      %s41 = int_to_ptr.hbm [resolvable:$true] %s40
      %s42 = sshll.u32 [#allocation7], 4
      %s43 = int_to_ptr.vmem [resolvable:$true] %s42
      %45 = dma.hbm_to_vmem [thread:$0]  %s41, 64, %s43, [#allocation6]
    $region13: #{tpu_custom_call.1} parent=1 // pred_fallthru
      _
    // Predicated region
    $region14: #{tpu_custom_call.1} parent=1 // pred_check
      _
    $region15: #{tpu_custom_call.1} parent=1 // pred_check_branch
      %47 = sbr.rel (0) target = $region17
    $region16: #{tpu_custom_call.1} parent=1 // pred_region
      %49 = vsyncadd [#allocation9], 0
      %s50 = sshll.u32 %s3, 4
      %s51 = int_to_ptr.hbm [resolvable:$true] %s50
      %s52 = sshll.u32 [#allocation8], 4
      %s53 = int_to_ptr.vmem [resolvable:$true] %s52
      %58 = dma.hbm_to_vmem [thread:$0]  %s51, 4736, %s53, [#allocation9], 64, 64, 4
    $region17: #{tpu_custom_call.1} parent=1 // pred_fallthru
      _
    // Predicated region
    $region18: #{tpu_custom_call.1} parent=1 // pred_check
      _
    $region19: #{tpu_custom_call.1} parent=1 // pred_check_branch
      %60 = sbr.rel (0) target = $region21
    $region20: #{tpu_custom_call.1} parent=1 // pred_region
      %62 = dma.done [#allocation3], 64
    $region21: #{tpu_custom_call.1} parent=1 // pred_fallthru
      _
    // Predicated region
    $region22: #{tpu_custom_call.1} parent=1 // pred_check
      _
    $region23: #{tpu_custom_call.1} parent=1 // pred_check_branch
      %64 = sbr.rel (0) target = $region25
    $region24: #{tpu_custom_call.1} parent=1 // pred_region
      %66 = dma.done [#allocation6], 64
    $region25: #{tpu_custom_call.1} parent=1 // pred_fallthru
      _
    // Predicated region
    $region26: #{tpu_custom_call.1} parent=1 // pred_check
      _
    $region27: #{tpu_custom_call.1} parent=1 // pred_check_branch
      %68 = sbr.rel (0) target = $region29
    $region28: #{tpu_custom_call.1} parent=1 // pred_region
      %70 = dma.done [#allocation6], 64
    $region29: #{tpu_custom_call.1} parent=1 // pred_fallthru
      _
    // Predicated region
    $region30: #{tpu_custom_call.1} parent=1 // pred_check
      _
    $region31: #{tpu_custom_call.1} parent=1 // pred_check_branch
      %72 = sbr.rel (0) target = $region33
    $region32: #{tpu_custom_call.1} parent=1 // pred_region
      %74 = dma.done [#allocation9], 4736
    $region33: #{tpu_custom_call.1} parent=1 // pred_fallthru
      _
    %v76 = vld [vmem:[#allocation2] sm:$0xf]
    %v77 = vld [vmem:[#allocation8] sm:$0xf]
    %v78 = vld [vmem:[#allocation8 + $0x4] sm:$0xf]
    %v79 = vld [vmem:[#allocation8 + $0x8] sm:$0xf]
    %v80 = vld [vmem:[#allocation8 + $0xc] sm:$0xf]
    %v81 = vld [vmem:[#allocation5] sm:$0xf]
    %v82 = vld [vmem:[#allocation8 + $0x10] sm:$0xf]
    %v83 = vld [vmem:[#allocation8 + $0x14] sm:$0xf]
    %v84 = vld [vmem:[#allocation8 + $0x18] sm:$0xf]
    %v85 = vld [vmem:[#allocation8 + $0x1c] sm:$0xf]
    %v86 = vld [vmem:[#allocation8 + $0x20] sm:$0xf]
    %v87 = vld [vmem:[#allocation8 + $0x24] sm:$0xf]
    %v94 = vunpack.c.l.b16 %v82
    %v95 = vunpack.c.l.b16 %v83
    %v96 = vunpack.c.l.b16 %v84
    %v97 = vunpack.c.l.b16 %v85
    %v98 = vunpack.c.l.b16 %v86
    %v99 = vunpack.c.l.b16 %v87
    %v100 = vpack.c.b16 %v95, %v94
    %v101 = vpack.c.b16 %v97, %v96
    %v102 = vpack.c.b16 %v99, %v98
    %vm106 = vcmask 392192
    %v108 = vsel %vm106, %v81, 0
    %110 = vmatpush.bf16.msra.mxu0 0
    %111 = vmatpush.bf16.msra.mxu0 0
    %112 = vmatpush.bf16.msra.mxu0 0
    %113 = vmatpush.bf16.msra.mxu0 0
    %114 = vmatpush.bf16.msra.mxu0 0
    %115 = vmatpush.bf16.msra.mxu0 %v102
    %116 = vmatpush.bf16.msra.mxu0 %v101
    %117 = vmatpush.bf16.msra.mxu0 %v100
    %118 = vmatmul.bf16.gmra.mxu0 %v108
    %v119 = vpop.f32.mrf.mxu0
    %v120 = vadd.f32 0.0, %v119
    %v121 = vpop.f32.mrf.mxu0
    %122 = vdwg.mxu0
    %v127 = vunpack.c.l.b16 %v77
    %v128 = vunpack.c.l.b16 %v78
    %v129 = vunpack.c.l.b16 %v79
    %v130 = vunpack.c.l.b16 %v80
    %v131 = vpack.c.b16 %v128, %v127
    %v132 = vpack.c.b16 %v130, %v129
    %vm135 = vcmask 261120
    %v137 = vsel %vm135, %v76, 0
    %139 = vmatpush.bf16.msra.mxu0 0
    %140 = vmatpush.bf16.msra.mxu0 0
    %141 = vmatpush.bf16.msra.mxu0 0
    %142 = vmatpush.bf16.msra.mxu0 0
    %143 = vmatpush.bf16.msra.mxu0 0
    %144 = vmatpush.bf16.msra.mxu0 0
    %145 = vmatpush.bf16.msra.mxu0 %v132
    %146 = vmatpush.bf16.msra.mxu0 %v131
    %147 = vmatmul.bf16.gmra.mxu0 %v137
    %v148 = vpop.f32.mrf.mxu0
    %v149 = vadd.f32 %v120, %v148
    %v150 = vpop.f32.mrf.mxu0
    %151 = vdwg.mxu0
    %v152 = vld [vmem:[#allocation7] sm:$0xf]
    %v153 = vld [vmem:[#allocation8 + $0x28] sm:$0xf]
    %v154 = vld [vmem:[#allocation8 + $0x2c] sm:$0xf]
    %v155 = vld [vmem:[#allocation8 + $0x30] sm:$0xf]
    %v156 = vld [vmem:[#allocation8 + $0x34] sm:$0xf]
    %v157 = vld [vmem:[#allocation8 + $0x38] sm:$0xf]
    %v158 = vld [vmem:[#allocation8 + $0x3c] sm:$0xf]
    %v159 = vld [vmem:[#allocation8 + $0x40] sm:$0xf]
    %v160 = vld [vmem:[#allocation8 + $0x44] sm:$0xf]
    %v169 = vunpack.c.l.b16 %v153
    %v170 = vunpack.c.l.b16 %v154
    %v171 = vunpack.c.l.b16 %v155
    %v172 = vunpack.c.l.b16 %v156
    %v173 = vunpack.c.l.b16 %v157
    %v174 = vunpack.c.l.b16 %v158
    %v175 = vunpack.c.l.b16 %v159
    %v176 = vunpack.c.l.b16 %v160
    %v177 = vpack.c.b16 %v170, %v169
    %v178 = vpack.c.b16 %v172, %v171
    %v179 = vpack.c.b16 %v174, %v173
    %v180 = vpack.c.b16 %v176, %v175
    %vm185 = vcmask 523264
    %v187 = vsel %vm185, %v152, 0
    %189 = vmatpush.bf16.msra.mxu0 0
    %190 = vmatpush.bf16.msra.mxu0 0
    %191 = vmatpush.bf16.msra.mxu0 0
    %192 = vmatpush.bf16.msra.mxu0 0
    %193 = vmatpush.bf16.msra.mxu0 %v180
    %194 = vmatpush.bf16.msra.mxu0 %v179
    %195 = vmatpush.bf16.msra.mxu0 %v178
    %196 = vmatpush.bf16.msra.mxu0 %v177
    %197 = vmatmul.bf16.gmra.mxu0 %v187
    %v198 = vpop.f32.mrf.mxu0
    %v199 = vadd.f32 0.0, %v198
    %v200 = vpop.f32.mrf.mxu0
    %201 = vdwg.mxu0
    %v202 = vadd.f32 %v149, %v199
    %v203 = vld [vmem:[#allocation8 + $0x48] sm:$0x1]
    %v204 = vunpack.c.l.bf16 %v203
    %v205 = vperm.slane %v204, 0
    %v206 = vadd.f32 %v202, %v205
    %v207 = vmax.f32 %v206, 0.0
    %v208 = vpack.c.bf16 %v207, %v207
    %v209 = vld [vmem:[#allocation8 + $0x50] sm:$0xf]
    %v210 = vld [vmem:[#allocation8 + $0x54] sm:$0xf]
    %v211 = vld [vmem:[#allocation8 + $0x58] sm:$0xf]
    %v212 = vld [vmem:[#allocation8 + $0x5c] sm:$0xf]
    %v213 = vld [vmem:[#allocation8 + $0x60] sm:$0xf]
    %v214 = vld [vmem:[#allocation8 + $0x64] sm:$0xf]
    %v215 = vld [vmem:[#allocation8 + $0x68] sm:$0xf]
    %v216 = vld [vmem:[#allocation8 + $0x6c] sm:$0xf]
    %v217 = vld [vmem:[#allocation8 + $0x70] sm:$0xf]
    %v218 = vld [vmem:[#allocation8 + $0x74] sm:$0xf]
    %v219 = vld [vmem:[#allocation8 + $0x78] sm:$0xf]
    %v220 = vld [vmem:[#allocation8 + $0x7c] sm:$0xf]
    %v221 = vld [vmem:[#allocation8 + $0x80] sm:$0xf]
    %v222 = vld [vmem:[#allocation8 + $0x84] sm:$0xf]
    %v223 = vld [vmem:[#allocation8 + $0x88] sm:$0xf]
    %v224 = vld [vmem:[#allocation8 + $0x8c] sm:$0xf]
    %v225 = vld [vmem:[#allocation8 + $0x90] sm:$0x1]
    %v226 = vunpack.c.l.bf16 %v225
    %v227 = vperm.slane %v226, 0
    %v244 = vunpack.c.l.b16 %v209
    %v245 = vunpack.c.l.b16 %v210
    %v246 = vunpack.c.l.b16 %v211
    %v247 = vunpack.c.l.b16 %v212
    %v248 = vunpack.c.l.b16 %v213
    %v249 = vunpack.c.l.b16 %v214
    %v250 = vunpack.c.l.b16 %v215
    %v251 = vunpack.c.l.b16 %v216
    %v252 = vunpack.c.l.b16 %v217
    %v253 = vunpack.c.l.b16 %v218
    %v254 = vunpack.c.l.b16 %v219
    %v255 = vunpack.c.l.b16 %v220
    %v256 = vunpack.c.l.b16 %v221
    %v257 = vunpack.c.l.b16 %v222
    %v258 = vunpack.c.l.b16 %v223
    %v259 = vunpack.c.l.b16 %v224
    %v260 = vpack.c.b16 %v245, %v244
    %v261 = vpack.c.b16 %v247, %v246
    %v262 = vpack.c.b16 %v249, %v248
    %v263 = vpack.c.b16 %v251, %v250
    %v264 = vpack.c.b16 %v253, %v252
    %v265 = vpack.c.b16 %v255, %v254
    %v266 = vpack.c.b16 %v257, %v256
    %v267 = vpack.c.b16 %v259, %v258
    %276 = vmatpush.bf16.msra.mxu0 %v267
    %277 = vmatpush.bf16.msra.mxu0 %v266
    %278 = vmatpush.bf16.msra.mxu0 %v265
    %279 = vmatpush.bf16.msra.mxu0 %v264
    %280 = vmatpush.bf16.msra.mxu0 %v263
    %281 = vmatpush.bf16.msra.mxu0 %v262
    %282 = vmatpush.bf16.msra.mxu0 %v261
    %283 = vmatpush.bf16.msra.mxu0 %v260
    %284 = vmatmul.bf16.gmra.mxu0 %v208
    %v285 = vpop.f32.mrf.mxu0
    %v286 = vadd.f32 %v227, %v285
    %v287 = vpop.f32.mrf.mxu0
    %288 = vdwg.mxu0
    %v289 = vmax.f32 %v286, 0.0
    %v290 = vpack.c.bf16 %v289, %v289
    %v291 = vld [vmem:[#allocation8 + $0x98] sm:$0xf]
    %v292 = vld [vmem:[#allocation8 + $0x9c] sm:$0xf]
    %v293 = vld [vmem:[#allocation8 + $0xa0] sm:$0xf]
    %v294 = vld [vmem:[#allocation8 + $0xa4] sm:$0xf]
    %v295 = vld [vmem:[#allocation8 + $0xa8] sm:$0xf]
    %v296 = vld [vmem:[#allocation8 + $0xac] sm:$0xf]
    %v297 = vld [vmem:[#allocation8 + $0xb0] sm:$0xf]
    %v298 = vld [vmem:[#allocation8 + $0xb4] sm:$0xf]
    %v299 = vld [vmem:[#allocation8 + $0xb8] sm:$0xf]
    %v300 = vld [vmem:[#allocation8 + $0xbc] sm:$0xf]
    %v301 = vld [vmem:[#allocation8 + $0xc0] sm:$0xf]
    %v302 = vld [vmem:[#allocation8 + $0xc4] sm:$0xf]
    %v303 = vld [vmem:[#allocation8 + $0xc8] sm:$0xf]
    %v304 = vld [vmem:[#allocation8 + $0xcc] sm:$0xf]
    %v305 = vld [vmem:[#allocation8 + $0xd0] sm:$0xf]
    %v306 = vld [vmem:[#allocation8 + $0xd4] sm:$0xf]
    %v307 = vld [vmem:[#allocation8 + $0xd8] sm:$0x1]
    %v308 = vunpack.c.l.bf16 %v307
    %v309 = vperm.slane %v308, 0
    %v326 = vunpack.c.l.b16 %v291
    %v327 = vunpack.c.l.b16 %v292
    %v328 = vunpack.c.l.b16 %v293
    %v329 = vunpack.c.l.b16 %v294
    %v330 = vunpack.c.l.b16 %v295
    %v331 = vunpack.c.l.b16 %v296
    %v332 = vunpack.c.l.b16 %v297
    %v333 = vunpack.c.l.b16 %v298
    %v334 = vunpack.c.l.b16 %v299
    %v335 = vunpack.c.l.b16 %v300
    %v336 = vunpack.c.l.b16 %v301
    %v337 = vunpack.c.l.b16 %v302
    %v338 = vunpack.c.l.b16 %v303
    %v339 = vunpack.c.l.b16 %v304
    %v340 = vunpack.c.l.b16 %v305
    %v341 = vunpack.c.l.b16 %v306
    %v342 = vpack.c.b16 %v327, %v326
    %v343 = vpack.c.b16 %v329, %v328
    %v344 = vpack.c.b16 %v331, %v330
    %v345 = vpack.c.b16 %v333, %v332
    %v346 = vpack.c.b16 %v335, %v334
    %v347 = vpack.c.b16 %v337, %v336
    %v348 = vpack.c.b16 %v339, %v338
    %v349 = vpack.c.b16 %v341, %v340
    %358 = vmatpush.bf16.msra.mxu0 %v349
    %359 = vmatpush.bf16.msra.mxu0 %v348
    %360 = vmatpush.bf16.msra.mxu0 %v347
    %361 = vmatpush.bf16.msra.mxu0 %v346
    %362 = vmatpush.bf16.msra.mxu0 %v345
    %363 = vmatpush.bf16.msra.mxu0 %v344
    %364 = vmatpush.bf16.msra.mxu0 %v343
    %365 = vmatpush.bf16.msra.mxu0 %v342
    %366 = vmatmul.bf16.gmra.mxu0 %v290
    %v367 = vpop.f32.mrf.mxu0
    %v368 = vadd.f32 %v309, %v367
    %v369 = vpop.f32.mrf.mxu0
    %370 = vdwg.mxu0
    %v371 = vmul.f32 %v207, %v368
    %v372 = vpack.c.bf16 %v371, %v371
    %v373 = vld [vmem:[#allocation8 + $0xe0] sm:$0xf]
    %v374 = vld [vmem:[#allocation8 + $0xe4] sm:$0xf]
    %v375 = vld [vmem:[#allocation8 + $0xe8] sm:$0xf]
    %v376 = vld [vmem:[#allocation8 + $0xec] sm:$0xf]
    %v377 = vld [vmem:[#allocation8 + $0xf0] sm:$0xf]
    %v378 = vld [vmem:[#allocation8 + $0xf4] sm:$0xf]
    %v379 = vld [vmem:[#allocation8 + $0xf8] sm:$0xf]
    %v380 = vld [vmem:[#allocation8 + $0xfc] sm:$0xf]
    %v381 = vld [vmem:[#allocation8 + $0x100] sm:$0xf]
    %v382 = vld [vmem:[#allocation8 + $0x104] sm:$0xf]
    %v383 = vld [vmem:[#allocation8 + $0x108] sm:$0xf]
    %v384 = vld [vmem:[#allocation8 + $0x10c] sm:$0xf]
    %v385 = vld [vmem:[#allocation8 + $0x110] sm:$0xf]
    %v386 = vld [vmem:[#allocation8 + $0x114] sm:$0xf]
    %v387 = vld [vmem:[#allocation8 + $0x118] sm:$0xf]
    %v388 = vld [vmem:[#allocation8 + $0x11c] sm:$0xf]
    %v389 = vld [vmem:[#allocation8 + $0x120] sm:$0x1]
    %v390 = vunpack.c.l.bf16 %v389
    %v391 = vperm.slane %v390, 0
    %v408 = vunpack.c.l.b16 %v373
    %v409 = vunpack.c.l.b16 %v374
    %v410 = vunpack.c.l.b16 %v375
    %v411 = vunpack.c.l.b16 %v376
    %v412 = vunpack.c.l.b16 %v377
    %v413 = vunpack.c.l.b16 %v378
    %v414 = vunpack.c.l.b16 %v379
    %v415 = vunpack.c.l.b16 %v380
    %v416 = vunpack.c.l.b16 %v381
    %v417 = vunpack.c.l.b16 %v382
    %v418 = vunpack.c.l.b16 %v383
    %v419 = vunpack.c.l.b16 %v384
    %v420 = vunpack.c.l.b16 %v385
    %v421 = vunpack.c.l.b16 %v386
    %v422 = vunpack.c.l.b16 %v387
    %v423 = vunpack.c.l.b16 %v388
    %v424 = vpack.c.b16 %v409, %v408
    %v425 = vpack.c.b16 %v411, %v410
    %v426 = vpack.c.b16 %v413, %v412
    %v427 = vpack.c.b16 %v415, %v414
    %v428 = vpack.c.b16 %v417, %v416
    %v429 = vpack.c.b16 %v419, %v418
    %v430 = vpack.c.b16 %v421, %v420
    %v431 = vpack.c.b16 %v423, %v422
    %440 = vmatpush.bf16.msra.mxu0 %v431
    %441 = vmatpush.bf16.msra.mxu0 %v430
    %442 = vmatpush.bf16.msra.mxu0 %v429
    %443 = vmatpush.bf16.msra.mxu0 %v428
    %444 = vmatpush.bf16.msra.mxu0 %v427
    %445 = vmatpush.bf16.msra.mxu0 %v426
    %446 = vmatpush.bf16.msra.mxu0 %v425
    %447 = vmatpush.bf16.msra.mxu0 %v424
    %448 = vmatmul.bf16.gmra.mxu0 %v372
    %v449 = vpop.f32.mrf.mxu0
    %v450 = vadd.f32 %v391, %v449
    %v451 = vpop.f32.mrf.mxu0
    %452 = vdwg.mxu0
    %453 = vst [vmem:[#allocation10] sm:$0xff] %v450
    // Predicated region
    $region34: #{tpu_custom_call.1} parent=1 // pred_check
      _
    $region35: #{tpu_custom_call.1} parent=1 // pred_check_branch
      %455 = sbr.rel (0) target = $region37
    $region36: #{tpu_custom_call.1} parent=1 // pred_region
      %457 = vsyncadd [#allocation4], 0
      %s459 = sshll.u32 [#allocation10], 4
      %s460 = int_to_ptr.vmem [resolvable:$true] %s459
      %s461 = sshll.u32 %s4, 4
      %s462 = int_to_ptr.hbm [resolvable:$true] %s461
      %464 = dma.vmem_to_hbm [thread:$0]  %s460, 128, %s462, [#allocation4]
    $region37: #{tpu_custom_call.1} parent=1 // pred_fallthru
      _
    // Predicated region
    $region38: #{tpu_custom_call.1} parent=1 // pred_check
      _
    $region39: #{tpu_custom_call.1} parent=1 // pred_check_branch
      %466 = sbr.rel (0) target = $region41
    $region40: #{tpu_custom_call.1} parent=1 // pred_region
      %468 = dma.done [#allocation4], 128
    $region41: #{tpu_custom_call.1} parent=1 // pred_fallthru
      _
    %469 = vsyncpa [#allocation3], 1
    %470 = vsyncpa [#allocation6], 1
    %471 = vsyncpa [#allocation9], 1
    %472 = vsyncpa [#allocation4], 1

</llo_original>
